<compile_context>
chip_gen: v7x
topology: tpu7x:2x2x1
jax: 0.10.0
libtpu: 0.0.40
codegen_flags: <defaults>
</compile_context>

<pallas_src>
import math
from functools import partial

import jax
import jax.numpy as jnp
from jax.experimental import pallas as pl
from jax.experimental.pallas import tpu as pltpu


# ----------------------------------------------------------------------------
# Synthetic "cfg" (small but consistent with the module)
# ----------------------------------------------------------------------------
POOLER_RESOLUTION = 4          # cfg.MODEL.ROI_BOX_HEAD.POOLER_RESOLUTION
POOLER_SCALES = (0.25, 0.125)  # cfg.MODEL.ROI_BOX_HEAD.POOLER_SCALES (2 FPN lvls)
POOLER_SAMPLING_RATIO = 2      # cfg.MODEL.ROI_BOX_HEAD.POOLER_SAMPLING_RATIO
OUT_CHANNELS = 16              # cfg.MODEL.BACKBONE.OUT_CHANNELS
MLP_HEAD_DIM = 128             # cfg.MODEL.ROI_BOX_HEAD.MLP_HEAD_DIM
USE_GN = False                 # cfg.MODEL.ROI_BOX_HEAD.USE_GN

INPUT_SIZE = OUT_CHANNELS * POOLER_RESOLUTION ** 2   # 16 * 4 * 4 = 256
ROW_TILE = 128                 # MXU M-tile for the fused MLP kernel


# ----------------------------------------------------------------------------
# Pooler (ROIAlign over FPN levels) -- plain JAX glue, semantics follow
# maskrcnn_benchmark's legacy (aligned=False) ROIAlign + LevelMapper.
# Each ROI is pooled exactly once, at its assigned level.
# ----------------------------------------------------------------------------
def _bilinear_interpolate(feat, y, x, h_valid, w_valid):
    """feat: (C, Hp, Wp) (zero-padded); y, x: arrays of sample coords.

    h_valid / w_valid are the *unpadded* spatial extents of this level,
    so clamping matches running ROIAlign on the original (C, H_l, W_l) map.
    Returns (C, *y.shape).
    """
    hf = h_valid.astype(jnp.float32)
    wf = w_valid.astype(jnp.float32)
    invalid = (y < -1.0) | (y > hf) | (x < -1.0) | (x > wf)
    y = jnp.maximum(y, 0.0)
    x = jnp.maximum(x, 0.0)
    y_low = jnp.floor(y).astype(jnp.int32)
    x_low = jnp.floor(x).astype(jnp.int32)
    y_at_edge = y_low >= h_valid - 1
    x_at_edge = x_low >= w_valid - 1
    y_low = jnp.where(y_at_edge, h_valid - 1, y_low)
    x_low = jnp.where(x_at_edge, w_valid - 1, x_low)
    y_high = jnp.where(y_at_edge, h_valid - 1, y_low + 1)
    x_high = jnp.where(x_at_edge, w_valid - 1, x_low + 1)
    yv = jnp.where(y_at_edge, y_low.astype(jnp.float32), y)
    xv = jnp.where(x_at_edge, x_low.astype(jnp.float32), x)
    ly = yv - y_low.astype(jnp.float32)
    lx = xv - x_low.astype(jnp.float32)
    hy = 1.0 - ly
    hx = 1.0 - lx
    v1 = feat[:, y_low, x_low]     # (C, ...)
    v2 = feat[:, y_low, x_high]
    v3 = feat[:, y_high, x_low]
    v4 = feat[:, y_high, x_high]
    val = hy * hx * v1 + hy * lx * v2 + ly * hx * v3 + ly * lx * v4
    return jnp.where(invalid, jnp.zeros_like(val), val)


def _roi_align_one(feat, box, spatial_scale, h_valid, w_valid,
                   resolution, sampling_ratio):
    """feat: (C, Hp, Wp); box: (4,) xyxy in image coords. Returns (C, R, R)."""
    x1, y1, x2, y2 = box[0], box[1], box[2], box[3]
    roi_start_w = x1 * spatial_scale
    roi_start_h = y1 * spatial_scale
    roi_w = jnp.maximum(x2 * spatial_scale - roi_start_w, 1.0)
    roi_h = jnp.maximum(y2 * spatial_scale - roi_start_h, 1.0)
    bin_h = roi_h / resolution
    bin_w = roi_w / resolution
    grid = sampling_ratio  # sampling_ratio > 0 path

    p = jnp.arange(resolution, dtype=jnp.float32)
    g = jnp.arange(grid, dtype=jnp.float32)
    ys = roi_start_h + p[:, None] * bin_h + (g[None, :] + 0.5) * bin_h / grid
    xs = roi_start_w + p[:, None] * bin_w + (g[None, :] + 0.5) * bin_w / grid
    yy = ys.reshape(-1)   # (R*G,) ordered (ph, iy)
    xx = xs.reshape(-1)   # (R*G,) ordered (pw, ix)
    n = yy.shape[0]
    Y = jnp.broadcast_to(yy[:, None], (n, n))
    X = jnp.broadcast_to(xx[None, :], (n, n))

    vals = _bilinear_interpolate(feat, Y, X, h_valid, w_valid)   # (C, R*G, R*G)
    C = feat.shape[0]
    vals = vals.reshape(C, resolution, grid, resolution, grid)
    return vals.mean(axis=(2, 4))                                # (C, R, R)


def fpn_pooler_flat(features, boxes, img_ids, scales, resolution,
                    sampling_ratio):
    """features: list of (B, C, H_l, W_l); boxes: (K, 4) xyxy; img_ids: (K,).

    Returns the lane-dense (K, C*R*R) slab consumed directly by the MLP
    kernel (matches torch's `x.view(N, -1)` on contiguous NCHW output).
    """
    # --- LevelMapper (canonical level 4, canonical scale 224, eps 1e-6) ---
    lvl_min = -math.log2(scales[0])
    lvl_max = -math.log2(scales[-1])
    area = (boxes[:, 2] - boxes[:, 0]) * (boxes[:, 3] - boxes[:, 1])
    s = jnp.sqrt(area)
    target = jnp.floor(4.0 + jnp.log2(s / 224.0 + 1e-6))
    target = jnp.clip(target, lvl_min, lvl_max)
    levels = (target - lvl_min).astype(jnp.int32)                # (K,)

    # --- pad levels to common spatial extent so each ROI gathers only its
    #     assigned level's map (1x ROIAlign work instead of L x) ---
    h_max = max(f.shape[2] for f in features)
    w_max = max(f.shape[3] for f in features)
    padded = jnp.stack(
        [jnp.pad(f, ((0, 0), (0, 0),
                     (0, h_max - f.shape[2]), (0, w_max - f.shape[3])))
         for f in features], axis=0)                              # (L, B, C, Hm, Wm)
    scales_arr = jnp.asarray(scales, dtype=jnp.float32)
    h_arr = jnp.asarray([f.shape[2] for f in features], dtype=jnp.int32)
    w_arr = jnp.asarray([f.shape[3] for f in features], dtype=jnp.int32)

    def one_roi(box, img_id, lvl):
        feat = padded[lvl, img_id]                                # (C, Hm, Wm)
        out = _roi_align_one(feat, box, scales_arr[lvl],
                             h_arr[lvl], w_arr[lvl],
                             resolution, sampling_ratio)          # (C, R, R)
        return out.reshape(-1)                                    # (C*R*R,)

    return jax.vmap(one_roi)(boxes, img_ids, levels)              # (K, C*R*R)


# ----------------------------------------------------------------------------
# Pallas kernel: fused fc6 -> ReLU -> fc7 -> ReLU, gridded over ROI rows.
# bf16 operands on the MXU, f32 accumulation, bias+ReLU in f32.
# ----------------------------------------------------------------------------
def _mlp_kernel(x_ref, w6_ref, b6_ref, w7_ref, b7_ref, o_ref):
    h = jnp.dot(x_ref[...], w6_ref[...],
                preferred_element_type=jnp.float32)
    h = jnp.maximum(h + b6_ref[...], 0.0)
    h = jnp.dot(h.astype(w7_ref.dtype), w7_ref[...],
                preferred_element_type=jnp.float32)
    o_ref[...] = jnp.maximum(h + b7_ref[...], 0.0)


def mlp_head(x, w6_t, b6, w7_t, b7, *, tm=ROW_TILE):
    """x: (K, IN) f32; w6_t: (IN, REP); w7_t: (REP, REP); b*: (1, REP)."""
    K, in_dim = x.shape
    rep = w6_t.shape[1]

    # Pad the ROI dimension so every kernel step presents a full MXU M-tile.
    k_pad = pl.cdiv(K, tm) * tm
    x_p = jnp.pad(x, ((0, k_pad - K), (0, 0)))

    out = pl.pallas_call(
        _mlp_kernel,
        out_shape=jax.ShapeDtypeStruct((k_pad, rep), jnp.float32),
        grid_spec=pltpu.PrefetchScalarGridSpec(
            num_scalar_prefetch=0,
            grid=(k_pad // tm,),
            in_specs=[
                pl.BlockSpec((tm, in_dim), lambda i: (i, 0)),     # x tile
                pl.BlockSpec((in_dim, rep), lambda i: (0, 0)),    # w6 (resident)
                pl.BlockSpec((1, rep), lambda i: (0, 0)),         # b6
                pl.BlockSpec((rep, rep), lambda i: (0, 0)),       # w7 (resident)
                pl.BlockSpec((1, rep), lambda i: (0, 0)),         # b7
            ],
            out_specs=pl.BlockSpec((tm, rep), lambda i: (i, 0)),
        ),
        compiler_params=pltpu.CompilerParams(
            dimension_semantics=("parallel",)),
    )(x_p.astype(jnp.bfloat16),
      w6_t.astype(jnp.bfloat16), b6,
      w7_t.astype(jnp.bfloat16), b7)
    return out[:K]


# ----------------------------------------------------------------------------
# Full forward: pooler -> (K, C*R*R) -> fc6/relu -> fc7/relu
# ----------------------------------------------------------------------------
@partial(jax.jit, static_argnames=())
def fpn2mlp_forward(features, boxes, img_ids, params):
    flat = fpn_pooler_flat(features, boxes, img_ids, POOLER_SCALES,
                           POOLER_RESOLUTION, POOLER_SAMPLING_RATIO)
    return mlp_head(flat, params["w6_t"], params["b6"],
                    params["w7_t"], params["b7"])


def make_fc_params(key):
    """make_fc(..., use_gn=False): kaiming_uniform_(a=1) weights, zero bias."""
    k6, k7 = jax.random.split(key)
    bound6 = math.sqrt(3.0 / INPUT_SIZE)          # sqrt(6 / ((1+a^2)*fan_in)), a=1
    bound7 = math.sqrt(3.0 / MLP_HEAD_DIM)
    w6 = jax.random.uniform(k6, (MLP_HEAD_DIM, INPUT_SIZE),
                            minval=-bound6, maxval=bound6, dtype=jnp.float32)
    w7 = jax.random.uniform(k7, (MLP_HEAD_DIM, MLP_HEAD_DIM),
                            minval=-bound7, maxval=bound7, dtype=jnp.float32)
    return {
        "w6_t": w6.T,                                           # (in, out)
        "b6": jnp.zeros((1, MLP_HEAD_DIM), jnp.float32),
        "w7_t": w7.T,
        "b7": jnp.zeros((1, MLP_HEAD_DIM), jnp.float32),
    }


if __name__ == "__main__":
    key = jax.random.PRNGKey(0)
    kf0, kf1, kp = jax.random.split(key, 3)

    B = 2
    # FPN feature maps (NCHW), one per pooler scale (image size ~256x256).
    feat_l0 = jax.random.normal(kf0, (B, OUT_CHANNELS, 64, 64), jnp.float32)
    feat_l1 = jax.random.normal(kf1, (B, OUT_CHANNELS, 32, 32), jnp.float32)
    features = [feat_l0, feat_l1]

    # Proposals: 4 boxes per image (xyxy, image coords), mixed sizes so the
    # level mapper assigns ROIs to both FPN levels.
    boxes = jnp.array(
        [[10.0, 10.0, 50.0, 60.0],
         [30.0, 5.0, 200.0, 220.0],
         [0.0, 0.0, 250.0, 250.0],
         [100.0, 120.0, 180.0, 200.0],
         [5.0, 5.0, 40.0, 40.0],
         [60.0, 60.0, 255.0, 255.0],
         [20.0, 30.0, 90.0, 150.0],
         [0.0, 100.0, 255.0, 200.0]], dtype=jnp.float32)
    img_ids = jnp.array([0, 0, 0, 0, 1, 1, 1, 1], dtype=jnp.int32)

    params = make_fc_params(kp)

    out = fpn2mlp_forward(features, boxes, img_ids, params)
    out = jax.block_until_ready(out)
    assert out.shape == (boxes.shape[0], MLP_HEAD_DIM)
    assert bool(jnp.all(jnp.isfinite(out)))

    # Loose numerical check vs a pure-JAX f32 reference (kernel uses bf16 MXU).
    flat_ref = fpn_pooler_flat(features, boxes, img_ids, POOLER_SCALES,
                               POOLER_RESOLUTION, POOLER_SAMPLING_RATIO)
    h_ref = jnp.maximum(flat_ref @ params["w6_t"] + params["b6"], 0.0)
    ref = jnp.maximum(h_ref @ params["w7_t"] + params["b7"], 0.0)
    assert bool(jnp.max(jnp.abs(out - ref)) < 1e-1)

    print("KERNEL_OK")
</pallas_src>

<mosaic_0001>
module attributes {stable_mosaic.version = 11 : i64} {
  func.func @_mlp_kernel(%arg0: i32, %arg1: memref<128x256xbf16, #tpu.memory_space<vmem>>, %arg2: memref<256x128xbf16, #tpu.memory_space<vmem>>, %arg3: memref<1x128xf32, #tpu.memory_space<vmem>>, %arg4: memref<128x128xbf16, #tpu.memory_space<vmem>>, %arg5: memref<1x128xf32, #tpu.memory_space<vmem>>, %arg6: memref<128x128xf32, #tpu.memory_space<vmem>>) attributes {dimension_semantics = [#tpu.dimension_semantics<parallel>], iteration_bounds = array<i64: 1>, scalar_prefetch = 0 : i64, scratch_operands = 0 : i64, tpu.core_type = #tpu.core_type<tc>, window_params = [{transform_indices = @transform_0, window_bounds = array<i64: 128, 256>}, {pipeline_mode = #tpu.pipeline_mode<synchronous>, transform_indices = @transform_1, window_bounds = array<i64: 256, 128>}, {pipeline_mode = #tpu.pipeline_mode<synchronous>, transform_indices = @transform_2, window_bounds = array<i64: 1, 128>}, {pipeline_mode = #tpu.pipeline_mode<synchronous>, transform_indices = @transform_3, window_bounds = array<i64: 128, 128>}, {pipeline_mode = #tpu.pipeline_mode<synchronous>, transform_indices = @transform_4, window_bounds = array<i64: 1, 128>}, {transform_indices = @transform_5, window_bounds = array<i64: 128, 128>}]} {
    %c0 = arith.constant 0 : index
    %c0_0 = arith.constant 0 : index
    %0 = vector.load %arg1[%c0, %c0_0] : memref<128x256xbf16, #tpu.memory_space<vmem>>, vector<128x256xbf16>
    %c0_1 = arith.constant 0 : index
    %c0_2 = arith.constant 0 : index
    %1 = vector.load %arg2[%c0_1, %c0_2] : memref<256x128xbf16, #tpu.memory_space<vmem>>, vector<256x128xbf16>
    %cst = arith.constant dense<0.000000e+00> : vector<128x128xf32>
    %2 = tpu.matmul %0, %1, %cst {dimension_numbers = #tpu.dot_dimension_numbers<[1], [0], [0], [1], [0, 0, 1, 1], [], []>} : vector<128x256xbf16>, vector<256x128xbf16>, vector<128x128xf32> -> vector<128x128xf32>
    %c0_3 = arith.constant 0 : index
    %c0_4 = arith.constant 0 : index
    %3 = vector.load %arg3[%c0_3, %c0_4] : memref<1x128xf32, #tpu.memory_space<vmem>>, vector<1x128xf32>
    %4 = vector.broadcast %3 : vector<1x128xf32> to vector<128x128xf32>
    %5 = arith.addf %2, %4 : vector<128x128xf32>
    %cst_5 = arith.constant 0.000000e+00 : f32
    %6 = vector.broadcast %cst_5 : f32 to vector<128x128xf32>
    %7 = arith.maximumf %5, %6 : vector<128x128xf32>
    %8 = arith.truncf %7 : vector<128x128xf32> to vector<128x128xbf16>
    %c0_6 = arith.constant 0 : index
    %c0_7 = arith.constant 0 : index
    %9 = vector.load %arg4[%c0_6, %c0_7] : memref<128x128xbf16, #tpu.memory_space<vmem>>, vector<128x128xbf16>
    %cst_8 = arith.constant dense<0.000000e+00> : vector<128x128xf32>
    %10 = tpu.matmul %8, %9, %cst_8 {dimension_numbers = #tpu.dot_dimension_numbers<[1], [0], [0], [1], [0, 0, 1, 1], [], []>} : vector<128x128xbf16>, vector<128x128xbf16>, vector<128x128xf32> -> vector<128x128xf32>
    %c0_9 = arith.constant 0 : index
    %c0_10 = arith.constant 0 : index
    %11 = vector.load %arg5[%c0_9, %c0_10] : memref<1x128xf32, #tpu.memory_space<vmem>>, vector<1x128xf32>
    %12 = vector.broadcast %11 : vector<1x128xf32> to vector<128x128xf32>
    %13 = arith.addf %10, %12 : vector<128x128xf32>
    %cst_11 = arith.constant 0.000000e+00 : f32
    %14 = vector.broadcast %cst_11 : f32 to vector<128x128xf32>
    %15 = arith.maximumf %13, %14 : vector<128x128xf32>
    %c0_12 = arith.constant 0 : index
    %c0_13 = arith.constant 0 : index
    %16 = vector.load %arg6[%c0_12, %c0_13] : memref<128x128xf32, #tpu.memory_space<vmem>>, vector<128x128xf32>
    tpu.vector_store %arg6[%c0_12, %c0_13], %15 {strides = array<i32>} : memref<128x128xf32, #tpu.memory_space<vmem>>, vector<128x128xf32>,
    return
  }
  func.func @transform_0(%arg0: i32) -> (i32, i32) {
    %c0_i32 = arith.constant 0 : i32
    %c0_i32_0 = arith.constant 0 : i32
    return %arg0, %c0_i32 : i32, i32
  }
  func.func @transform_1(%arg0: i32) -> (i32, i32) {
    %c0_i32 = arith.constant 0 : i32
    %c0_i32_0 = arith.constant 0 : i32
    %c0_i32_1 = arith.constant 0 : i32
    return %c0_i32, %c0_i32_0 : i32, i32
  }
  func.func @transform_2(%arg0: i32) -> (i32, i32) {
    %c0_i32 = arith.constant 0 : i32
    %c0_i32_0 = arith.constant 0 : i32
    %c0_i32_1 = arith.constant 0 : i32
    return %c0_i32, %c0_i32_0 : i32, i32
  }
  func.func @transform_3(%arg0: i32) -> (i32, i32) {
    %c0_i32 = arith.constant 0 : i32
    %c0_i32_0 = arith.constant 0 : i32
    %c0_i32_1 = arith.constant 0 : i32
    return %c0_i32, %c0_i32_0 : i32, i32
  }
  func.func @transform_4(%arg0: i32) -> (i32, i32) {
    %c0_i32 = arith.constant 0 : i32
    %c0_i32_0 = arith.constant 0 : i32
    %c0_i32_1 = arith.constant 0 : i32
    return %c0_i32, %c0_i32_0 : i32, i32
  }
  func.func @transform_5(%arg0: i32) -> (i32, i32) {
    %c0_i32 = arith.constant 0 : i32
    %c0_i32_0 = arith.constant 0 : i32
    return %arg0, %c0_i32 : i32, i32
  }
}

</mosaic_0001>

<llo_original>
// kernel: fpn2mlp_forward.1
$region0: #{fpn2mlp_forward.1}
  #allocation0 [shape = 'u32[]', space=smem, size = 0x4, offset = 0x4, fixed_abs, tag = 'smem constant byte address 0x4 - core index']
  #allocation1 [shape = 'u32[144,128]{1,0:T(1,128)}', space=vmem, size = 0x12000, scoped, tag = 'internal scratch']
  %s0 = inlined_call_operand.vmem [shape: bf16[128,256], index: 0, kind: input, shape index: {}]
  %s1 = inlined_call_operand.vmem [shape: bf16[256,128], index: 1, kind: input, shape index: {}]
  %s2 = inlined_call_operand.vmem [shape: f32[1,128], index: 2, kind: input, shape index: {}]
  %s3 = inlined_call_operand.vmem [shape: bf16[128,128], index: 3, kind: input, shape index: {}]
  %s4 = inlined_call_operand.vmem [shape: f32[1,128], index: 4, kind: input, shape index: {}]
  %s5 = inlined_call_operand.vmem [shape: f32[128,128], index: 5, kind: output, shape index: {}]
  %s6 = sld [smem:[#allocation0]]
  $region30: #{fpn2mlp_forward.1} parent=0
    _
  %s8 = ssub.s32 1, %s6
  %s9 = scalar_select 0, %s8, %s6
  // Predicated region
  $region2: #{fpn2mlp_forward.1} parent=0 // pred_check
    _
  $region3: #{fpn2mlp_forward.1} parent=0 // pred_check_branch
    %11 = sbr.rel (0) target = $region5
  $region4: #{fpn2mlp_forward.1} parent=0 // pred_region
    _
  $region5: #{fpn2mlp_forward.1} parent=0 // pred_fallthru
    _
  // Predicated region
  $region6: #{fpn2mlp_forward.1} parent=0 // pred_check
    _
  $region7: #{fpn2mlp_forward.1} parent=0 // pred_check_branch
    %13 = sbr.rel (0) target = $region9
  $region8: #{fpn2mlp_forward.1} parent=0 // pred_region
    _
  $region9: #{fpn2mlp_forward.1} parent=0 // pred_fallthru
    _
  // Predicated region
  $region10: #{fpn2mlp_forward.1} parent=0 // pred_check
    _
  $region11: #{fpn2mlp_forward.1} parent=0 // pred_check_branch
    %15 = sbr.rel (0) target = $region13
  $region12: #{fpn2mlp_forward.1} parent=0 // pred_region
    _
  $region13: #{fpn2mlp_forward.1} parent=0 // pred_fallthru
    _
  // Predicated region
  $region14: #{fpn2mlp_forward.1} parent=0 // pred_check
    _
  $region15: #{fpn2mlp_forward.1} parent=0 // pred_check_branch
    %17 = sbr.rel (0) target = $region17
  $region16: #{fpn2mlp_forward.1} parent=0 // pred_region
    _
  $region17: #{fpn2mlp_forward.1} parent=0 // pred_fallthru
    _
  // Predicated region
  $region18: #{fpn2mlp_forward.1} parent=0 // pred_check
    _
  $region19: #{fpn2mlp_forward.1} parent=0 // pred_check_branch
    %19 = sbr.rel (0) target = $region21
  $region20: #{fpn2mlp_forward.1} parent=0 // pred_region
    _
  $region21: #{fpn2mlp_forward.1} parent=0 // pred_fallthru
    _
  %v21 = vld [vmem:[%s0] sm:$0xff]
  %v22 = vld [vmem:[%s0 + $0x8] sm:$0xff]
  %v23 = vld [vmem:[%s0 + $0x10] sm:$0xff]
  %v24 = vld [vmem:[%s0 + $0x18] sm:$0xff]
  %v25 = vld [vmem:[%s0 + $0x20] sm:$0xff]
  %v26 = vld [vmem:[%s0 + $0x28] sm:$0xff]
  %v27 = vld [vmem:[%s0 + $0x30] sm:$0xff]
  %v28 = vld [vmem:[%s0 + $0x38] sm:$0xff]
  %v29 = vld [vmem:[%s0 + $0x40] sm:$0xff]
  %v30 = vld [vmem:[%s0 + $0x48] sm:$0xff]
  %v31 = vld [vmem:[%s0 + $0x50] sm:$0xff]
  %v32 = vld [vmem:[%s0 + $0x58] sm:$0xff]
  %v33 = vld [vmem:[%s0 + $0x60] sm:$0xff]
  %v34 = vld [vmem:[%s0 + $0x68] sm:$0xff]
  %v35 = vld [vmem:[%s0 + $0x70] sm:$0xff]
  %v36 = vld [vmem:[%s0 + $0x78] sm:$0xff]
  %v37 = vld [vmem:[%s1] sm:$0xf]
  %v38 = vld [vmem:[%s1 + $0x4] sm:$0xf]
  %v39 = vld [vmem:[%s1 + $0x8] sm:$0xf]
  %v40 = vld [vmem:[%s1 + $0xc] sm:$0xf]
  %v41 = vld [vmem:[%s1 + $0x10] sm:$0xf]
  %v42 = vld [vmem:[%s1 + $0x14] sm:$0xf]
  %v43 = vld [vmem:[%s1 + $0x18] sm:$0xf]
  %v44 = vld [vmem:[%s1 + $0x1c] sm:$0xf]
  %v45 = vld [vmem:[%s1 + $0x20] sm:$0xf]
  %v46 = vld [vmem:[%s1 + $0x24] sm:$0xf]
  %v47 = vld [vmem:[%s1 + $0x28] sm:$0xf]
  %v48 = vld [vmem:[%s1 + $0x2c] sm:$0xf]
  %v49 = vld [vmem:[%s1 + $0x30] sm:$0xf]
  %v50 = vld [vmem:[%s1 + $0x34] sm:$0xf]
  %v51 = vld [vmem:[%s1 + $0x38] sm:$0xf]
  %v52 = vld [vmem:[%s1 + $0x3c] sm:$0xf]
  %v53 = vld [vmem:[%s1 + $0x40] sm:$0xf]
  %v54 = vld [vmem:[%s1 + $0x44] sm:$0xf]
  %v55 = vld [vmem:[%s1 + $0x48] sm:$0xf]
  %v56 = vld [vmem:[%s1 + $0x4c] sm:$0xf]
  %v57 = vld [vmem:[%s1 + $0x50] sm:$0xf]
  %v58 = vld [vmem:[%s1 + $0x54] sm:$0xf]
  %v59 = vld [vmem:[%s1 + $0x58] sm:$0xf]
  %v60 = vld [vmem:[%s1 + $0x5c] sm:$0xf]
  %v61 = vld [vmem:[%s1 + $0x60] sm:$0xf]
  %v62 = vld [vmem:[%s1 + $0x64] sm:$0xf]
  %v63 = vld [vmem:[%s1 + $0x68] sm:$0xf]
  %v64 = vld [vmem:[%s1 + $0x6c] sm:$0xf]
  %v65 = vld [vmem:[%s1 + $0x70] sm:$0xf]
  %v66 = vld [vmem:[%s1 + $0x74] sm:$0xf]
  %v67 = vld [vmem:[%s1 + $0x78] sm:$0xf]
  %v68 = vld [vmem:[%s1 + $0x7c] sm:$0xf]
  %v69 = vld [vmem:[%s2] sm:$0x1]
  %v71 = vlaneseq
  %v72 = vshrl.u32 %v71, 7
  %v73 = vsub.s32 0, %v72
  %v74 = vrot.slane %v69, %v73
  %v92 = vunpack.c.l.b16 %v21
  %v93 = vunpack.c.h.b16 %v21
  %v94 = vunpack.c.l.b16 %v22
  %v95 = vunpack.c.h.b16 %v22
  %v96 = vunpack.c.l.b16 %v23
  %v97 = vunpack.c.h.b16 %v23
  %v98 = vunpack.c.l.b16 %v24
  %v99 = vunpack.c.h.b16 %v24
  %v100 = vunpack.c.l.b16 %v25
  %v101 = vunpack.c.h.b16 %v25
  %v102 = vunpack.c.l.b16 %v26
  %v103 = vunpack.c.h.b16 %v26
  %v104 = vunpack.c.l.b16 %v27
  %v105 = vunpack.c.h.b16 %v27
  %v106 = vunpack.c.l.b16 %v28
  %v107 = vunpack.c.h.b16 %v28
  %v108 = vunpack.c.l.b16 %v29
  %v109 = vunpack.c.h.b16 %v29
  %v110 = vunpack.c.l.b16 %v30
  %v111 = vunpack.c.h.b16 %v30
  %v112 = vunpack.c.l.b16 %v31
  %v113 = vunpack.c.h.b16 %v31
  %v114 = vunpack.c.l.b16 %v32
  %v115 = vunpack.c.h.b16 %v32
  %v116 = vunpack.c.l.b16 %v33
  %v117 = vunpack.c.h.b16 %v33
  %v118 = vunpack.c.l.b16 %v34
  %v119 = vunpack.c.h.b16 %v34
  %v120 = vunpack.c.l.b16 %v35
  %v121 = vunpack.c.h.b16 %v35
  %v122 = vunpack.c.l.b16 %v36
  %v123 = vunpack.c.h.b16 %v36
  %v124 = vpack.c.b16 %v94, %v92
  %v125 = vpack.c.b16 %v95, %v93
  %v126 = vpack.c.b16 %v98, %v96
  %v127 = vpack.c.b16 %v99, %v97
  %v128 = vpack.c.b16 %v102, %v100
  %v129 = vpack.c.b16 %v103, %v101
  %v130 = vpack.c.b16 %v106, %v104
  %v131 = vpack.c.b16 %v107, %v105
  %v132 = vpack.c.b16 %v110, %v108
  %v133 = vpack.c.b16 %v111, %v109
  %v134 = vpack.c.b16 %v114, %v112
  %v135 = vpack.c.b16 %v115, %v113
  %v136 = vpack.c.b16 %v118, %v116
  %v137 = vpack.c.b16 %v119, %v117
  %v138 = vpack.c.b16 %v122, %v120
  %v139 = vpack.c.b16 %v123, %v121
  %v188 = vunpack.c.l.b16 %v37
  %v189 = vunpack.c.l.b16 %v38
  %v190 = vunpack.c.l.b16 %v39
  %v191 = vunpack.c.l.b16 %v40
  %v192 = vunpack.c.l.b16 %v41
  %v193 = vunpack.c.l.b16 %v42
  %v194 = vunpack.c.l.b16 %v43
  %v195 = vunpack.c.l.b16 %v44
  %v196 = vunpack.c.l.b16 %v45
  %v197 = vunpack.c.l.b16 %v46
  %v198 = vunpack.c.l.b16 %v47
  %v199 = vunpack.c.l.b16 %v48
  %v200 = vunpack.c.l.b16 %v49
  %v201 = vunpack.c.l.b16 %v50
  %v202 = vunpack.c.l.b16 %v51
  %v203 = vunpack.c.l.b16 %v52
  %v204 = vunpack.c.l.b16 %v53
  %v205 = vunpack.c.l.b16 %v54
  %v206 = vunpack.c.l.b16 %v55
  %v207 = vunpack.c.l.b16 %v56
  %v208 = vunpack.c.l.b16 %v57
  %v209 = vunpack.c.l.b16 %v58
  %v210 = vunpack.c.l.b16 %v59
  %v211 = vunpack.c.l.b16 %v60
  %v212 = vunpack.c.l.b16 %v61
  %v213 = vunpack.c.l.b16 %v62
  %v214 = vunpack.c.l.b16 %v63
  %v215 = vunpack.c.l.b16 %v64
  %v216 = vunpack.c.l.b16 %v65
  %v217 = vunpack.c.l.b16 %v66
  %v218 = vunpack.c.l.b16 %v67
  %v219 = vunpack.c.l.b16 %v68
  %v220 = vpack.c.b16 %v189, %v188
  %v221 = vpack.c.b16 %v191, %v190
  %v222 = vpack.c.b16 %v193, %v192
  %v223 = vpack.c.b16 %v195, %v194
  %v224 = vpack.c.b16 %v197, %v196
  %v225 = vpack.c.b16 %v199, %v198
  %v226 = vpack.c.b16 %v201, %v200
  %v227 = vpack.c.b16 %v203, %v202
  %v228 = vpack.c.b16 %v205, %v204
  %v229 = vpack.c.b16 %v207, %v206
  %v230 = vpack.c.b16 %v209, %v208
  %v231 = vpack.c.b16 %v211, %v210
  %v232 = vpack.c.b16 %v213, %v212
  %v233 = vpack.c.b16 %v215, %v214
  %v234 = vpack.c.b16 %v217, %v216
  %v235 = vpack.c.b16 %v219, %v218
  %252 = vmatprep.subr.bf16.mxu0 0
  %253 = vmatpush1.bf16.msra.mxu0 %v220
  %254 = vmatprep.subr.bf16.mxu0 0
  %255 = vmatpush1.bf16.msra.mxu0 %v221
  %256 = vmatprep.subr.bf16.mxu0 0
  %257 = vmatpush1.bf16.msra.mxu0 %v222
  %258 = vmatprep.subr.bf16.mxu0 0
  %259 = vmatpush1.bf16.msra.mxu0 %v223
  %260 = vmatprep.subr.bf16.mxu0 0
  %261 = vmatpush1.bf16.msra.mxu0 %v224
  %262 = vmatprep.subr.bf16.mxu0 0
  %263 = vmatpush1.bf16.msra.mxu0 %v225
  %264 = vmatprep.subr.bf16.mxu0 0
  %265 = vmatpush1.bf16.msra.mxu0 %v226
  %266 = vmatprep.subr.bf16.mxu0 0
  %267 = vmatpush1.bf16.msra.mxu0 %v227
  %268 = vmatprep.subr.bf16.mxu0 0
  %269 = vmatpush1.bf16.msra.mxu0 %v228
  %270 = vmatprep.subr.bf16.mxu0 0
  %271 = vmatpush1.bf16.msra.mxu0 %v229
  %272 = vmatprep.subr.bf16.mxu0 0
  %273 = vmatpush1.bf16.msra.mxu0 %v230
  %274 = vmatprep.subr.bf16.mxu0 0
  %275 = vmatpush1.bf16.msra.mxu0 %v231
  %276 = vmatprep.subr.bf16.mxu0 0
  %277 = vmatpush1.bf16.msra.mxu0 %v232
  %278 = vmatprep.subr.bf16.mxu0 0
  %279 = vmatpush1.bf16.msra.mxu0 %v233
  %280 = vmatprep.subr.bf16.mxu0 0
  %281 = vmatpush1.bf16.msra.mxu0 %v234
  %282 = vmatprep.subr.bf16.mxu0 0
  %283 = vmatpush1.bf16.msra.mxu0 %v235
  %284 = vmatprep.mubr.bf16.mxu0 %v125
  %285 = vmatmul.mubr.bf16.gmra.mrb[0].mxu0 %v124
  %v286 = vpop.f32.mrb[0].mxu0
  %v287 = vadd.f32 %v74, %v286
  %v288 = vpop.f32.mrb[0].mxu0
  %v289 = vpop.f32.mrb[0].mxu0
  %v290 = vadd.f32 %v74, %v289
  %v291 = vpop.f32.mrb[0].mxu0
  %292 = vmatprep.mubr.bf16.mxu0 %v127
  %293 = vmatmul.mubr.bf16.gmra.mrb[0].mxu0 %v126
  %v294 = vpop.f32.mrb[0].mxu0
  %v295 = vadd.f32 %v74, %v294
  %v296 = vpop.f32.mrb[0].mxu0
  %v297 = vpop.f32.mrb[0].mxu0
  %v298 = vadd.f32 %v74, %v297
  %v299 = vpop.f32.mrb[0].mxu0
  %300 = vmatprep.mubr.bf16.mxu0 %v129
  %301 = vmatmul.mubr.bf16.gmra.mrb[0].mxu0 %v128
  %v302 = vpop.f32.mrb[0].mxu0
  %v303 = vadd.f32 %v74, %v302
  %v304 = vpop.f32.mrb[0].mxu0
  %v305 = vpop.f32.mrb[0].mxu0
  %v306 = vadd.f32 %v74, %v305
  %v307 = vpop.f32.mrb[0].mxu0
  %308 = vmatprep.mubr.bf16.mxu0 %v131
  %309 = vmatmul.mubr.bf16.gmra.mrb[0].mxu0 %v130
  %v310 = vpop.f32.mrb[0].mxu0
  %v311 = vadd.f32 %v74, %v310
  %v312 = vpop.f32.mrb[0].mxu0
  %v313 = vpop.f32.mrb[0].mxu0
  %v314 = vadd.f32 %v74, %v313
  %v315 = vpop.f32.mrb[0].mxu0
  %316 = vmatprep.mubr.bf16.mxu0 %v133
  %317 = vmatmul.mubr.bf16.gmra.mrb[0].mxu0 %v132
  %v318 = vpop.f32.mrb[0].mxu0
  %v319 = vadd.f32 %v74, %v318
  %v320 = vpop.f32.mrb[0].mxu0
  %v321 = vpop.f32.mrb[0].mxu0
  %v322 = vadd.f32 %v74, %v321
  %v323 = vpop.f32.mrb[0].mxu0
  %324 = vmatprep.mubr.bf16.mxu0 %v135
  %325 = vmatmul.mubr.bf16.gmra.mrb[0].mxu0 %v134
  %v326 = vpop.f32.mrb[0].mxu0
  %v327 = vadd.f32 %v74, %v326
  %v328 = vpop.f32.mrb[0].mxu0
  %v329 = vpop.f32.mrb[0].mxu0
  %v330 = vadd.f32 %v74, %v329
  %v331 = vpop.f32.mrb[0].mxu0
  %332 = vmatprep.mubr.bf16.mxu0 %v137
  %333 = vmatmul.mubr.bf16.gmra.mrb[0].mxu0 %v136
  %v334 = vpop.f32.mrb[0].mxu0
  %v335 = vadd.f32 %v74, %v334
  %v336 = vpop.f32.mrb[0].mxu0
  %v337 = vpop.f32.mrb[0].mxu0
  %v338 = vadd.f32 %v74, %v337
  %v339 = vpop.f32.mrb[0].mxu0
  %340 = vmatprep.mubr.bf16.mxu0 %v139
  %341 = vmatmul.mubr.bf16.gmra.mrb[0].mxu0 %v138
  %v342 = vpop.f32.mrb[0].mxu0
  %v343 = vadd.f32 %v74, %v342
  %v344 = vpop.f32.mrb[0].mxu0
  %v345 = vpop.f32.mrb[0].mxu0
  %v346 = vadd.f32 %v74, %v345
  %v347 = vpop.f32.mrb[0].mxu0
  %348 = vdwg.mxu0
  %v349 = vmax.f32 %v287, 0.0
  %v350 = vmax.f32 %v290, 0.0
  %v351 = vmax.f32 %v295, 0.0
  %v352 = vmax.f32 %v298, 0.0
  %v353 = vmax.f32 %v303, 0.0
  %v354 = vmax.f32 %v306, 0.0
  %v355 = vmax.f32 %v311, 0.0
  %v356 = vmax.f32 %v314, 0.0
  %v357 = vmax.f32 %v319, 0.0
  %v358 = vmax.f32 %v322, 0.0
  %v359 = vmax.f32 %v327, 0.0
  %v360 = vmax.f32 %v330, 0.0
  %v361 = vmax.f32 %v335, 0.0
  %v362 = vmax.f32 %v338, 0.0
  %v363 = vmax.f32 %v343, 0.0
  %v364 = vmax.f32 %v346, 0.0
  %v365 = vpack.c.bf16 %v350, %v349
  %v366 = vpack.c.bf16 %v352, %v351
  %v367 = vpack.c.bf16 %v354, %v353
  %v368 = vpack.c.bf16 %v356, %v355
  %v369 = vpack.c.bf16 %v358, %v357
  %v370 = vpack.c.bf16 %v360, %v359
  %v371 = vpack.c.bf16 %v362, %v361
  %v372 = vpack.c.bf16 %v364, %v363
  %v373 = vld [vmem:[%s3] sm:$0xf]
  %v374 = vld [vmem:[%s3 + $0x4] sm:$0xf]
  %v375 = vld [vmem:[%s3 + $0x8] sm:$0xf]
  %v376 = vld [vmem:[%s3 + $0xc] sm:$0xf]
  %v377 = vld [vmem:[%s3 + $0x10] sm:$0xf]
  %v378 = vld [vmem:[%s3 + $0x14] sm:$0xf]
  %v379 = vld [vmem:[%s3 + $0x18] sm:$0xf]
  %v380 = vld [vmem:[%s3 + $0x1c] sm:$0xf]
  %v381 = vld [vmem:[%s3 + $0x20] sm:$0xf]
  %v382 = vld [vmem:[%s3 + $0x24] sm:$0xf]
  %v383 = vld [vmem:[%s3 + $0x28] sm:$0xf]
  %v384 = vld [vmem:[%s3 + $0x2c] sm:$0xf]
  %v385 = vld [vmem:[%s3 + $0x30] sm:$0xf]
  %v386 = vld [vmem:[%s3 + $0x34] sm:$0xf]
  %v387 = vld [vmem:[%s3 + $0x38] sm:$0xf]
  %v388 = vld [vmem:[%s3 + $0x3c] sm:$0xf]
  %v389 = vld [vmem:[%s4] sm:$0x1]
  %v391 = vlaneseq
  %v392 = vshrl.u32 %v391, 7
  %v393 = vsub.s32 0, %v392
  %v394 = vrot.slane %v389, %v393
  %v412 = vunpack.c.l.b16 %v373
  %v413 = vunpack.c.l.b16 %v374
  %v414 = vunpack.c.l.b16 %v375
  %v415 = vunpack.c.l.b16 %v376
  %v416 = vunpack.c.l.b16 %v377
  %v417 = vunpack.c.l.b16 %v378
  %v418 = vunpack.c.l.b16 %v379
  %v419 = vunpack.c.l.b16 %v380
  %v420 = vunpack.c.l.b16 %v381
  %v421 = vunpack.c.l.b16 %v382
  %v422 = vunpack.c.l.b16 %v383
  %v423 = vunpack.c.l.b16 %v384
  %v424 = vunpack.c.l.b16 %v385
  %v425 = vunpack.c.l.b16 %v386
  %v426 = vunpack.c.l.b16 %v387
  %v427 = vunpack.c.l.b16 %v388
  %v428 = vpack.c.b16 %v413, %v412
  %v429 = vpack.c.b16 %v415, %v414
  %v430 = vpack.c.b16 %v417, %v416
  %v431 = vpack.c.b16 %v419, %v418
  %v432 = vpack.c.b16 %v421, %v420
  %v433 = vpack.c.b16 %v423, %v422
  %v434 = vpack.c.b16 %v425, %v424
  %v435 = vpack.c.b16 %v427, %v426
  %444 = vmatprep.subr.bf16.mxu0 0
  %445 = vmatpush1.bf16.msra.mxu0 %v428
  %446 = vmatprep.subr.bf16.mxu0 0
  %447 = vmatpush1.bf16.msra.mxu0 %v429
  %448 = vmatprep.subr.bf16.mxu0 0
  %449 = vmatpush1.bf16.msra.mxu0 %v430
  %450 = vmatprep.subr.bf16.mxu0 0
  %451 = vmatpush1.bf16.msra.mxu0 %v431
  %452 = vmatprep.subr.bf16.mxu0 0
  %453 = vmatpush1.bf16.msra.mxu0 %v432
  %454 = vmatprep.subr.bf16.mxu0 0
  %455 = vmatpush1.bf16.msra.mxu0 %v433
  %456 = vmatprep.subr.bf16.mxu0 0
  %457 = vmatpush1.bf16.msra.mxu0 %v434
  %458 = vmatprep.subr.bf16.mxu0 0
  %459 = vmatpush1.bf16.msra.mxu0 %v435
  %460 = vmatprep.subr.bf16.mxu0 0
  %461 = vmatpush1.bf16.msra.mxu0 0
  %462 = vmatprep.subr.bf16.mxu0 0
  %463 = vmatpush1.bf16.msra.mxu0 0
  %464 = vmatprep.subr.bf16.mxu0 0
  %465 = vmatpush1.bf16.msra.mxu0 0
  %466 = vmatprep.subr.bf16.mxu0 0
  %467 = vmatpush1.bf16.msra.mxu0 0
  %468 = vmatprep.subr.bf16.mxu0 0
  %469 = vmatpush1.bf16.msra.mxu0 0
  %470 = vmatprep.subr.bf16.mxu0 0
  %471 = vmatpush1.bf16.msra.mxu0 0
  %472 = vmatprep.subr.bf16.mxu0 0
  %473 = vmatpush1.bf16.msra.mxu0 0
  %474 = vmatprep.subr.bf16.mxu0 0
  %475 = vmatpush1.bf16.msra.mxu0 0
  %476 = vmatprep.mubr.bf16.mxu0 0
  %477 = vmatmul.mubr.bf16.gmra.mrb[0].mxu0 %v365
  %v478 = vpop.f32.mrb[0].mxu0
  %v479 = vadd.f32 %v394, %v478
  %v480 = vpop.f32.mrb[0].mxu0
  %v481 = vpop.f32.mrb[0].mxu0
  %v482 = vadd.f32 %v394, %v481
  %v483 = vpop.f32.mrb[0].mxu0
  %484 = vmatprep.mubr.bf16.mxu0 0
  %485 = vmatmul.mubr.bf16.gmra.mrb[0].mxu0 %v366
  %v486 = vpop.f32.mrb[0].mxu0
  %v487 = vadd.f32 %v394, %v486
  %v488 = vpop.f32.mrb[0].mxu0
  %v489 = vpop.f32.mrb[0].mxu0
  %v490 = vadd.f32 %v394, %v489
  %v491 = vpop.f32.mrb[0].mxu0
  %492 = vmatprep.mubr.bf16.mxu0 0
  %493 = vmatmul.mubr.bf16.gmra.mrb[0].mxu0 %v367
  %v494 = vpop.f32.mrb[0].mxu0
  %v495 = vadd.f32 %v394, %v494
  %v496 = vpop.f32.mrb[0].mxu0
  %v497 = vpop.f32.mrb[0].mxu0
  %v498 = vadd.f32 %v394, %v497
  %v499 = vpop.f32.mrb[0].mxu0
  %500 = vmatprep.mubr.bf16.mxu0 0
  %501 = vmatmul.mubr.bf16.gmra.mrb[0].mxu0 %v368
  %v502 = vpop.f32.mrb[0].mxu0
  %v503 = vadd.f32 %v394, %v502
  %v504 = vpop.f32.mrb[0].mxu0
  %v505 = vpop.f32.mrb[0].mxu0
  %v506 = vadd.f32 %v394, %v505
  %v507 = vpop.f32.mrb[0].mxu0
  %508 = vmatprep.mubr.bf16.mxu0 0
  %509 = vmatmul.mubr.bf16.gmra.mrb[0].mxu0 %v369
  %v510 = vpop.f32.mrb[0].mxu0
  %v511 = vadd.f32 %v394, %v510
  %v512 = vpop.f32.mrb[0].mxu0
  %v513 = vpop.f32.mrb[0].mxu0
  %v514 = vadd.f32 %v394, %v513
  %v515 = vpop.f32.mrb[0].mxu0
  %516 = vmatprep.mubr.bf16.mxu0 0
  %517 = vmatmul.mubr.bf16.gmra.mrb[0].mxu0 %v370
  %v518 = vpop.f32.mrb[0].mxu0
  %v519 = vadd.f32 %v394, %v518
  %v520 = vpop.f32.mrb[0].mxu0
  %v521 = vpop.f32.mrb[0].mxu0
  %v522 = vadd.f32 %v394, %v521
  %v523 = vpop.f32.mrb[0].mxu0
  %524 = vmatprep.mubr.bf16.mxu0 0
  %525 = vmatmul.mubr.bf16.gmra.mrb[0].mxu0 %v371
  %v526 = vpop.f32.mrb[0].mxu0
  %v527 = vadd.f32 %v394, %v526
  %v528 = vpop.f32.mrb[0].mxu0
  %v529 = vpop.f32.mrb[0].mxu0
  %v530 = vadd.f32 %v394, %v529
  %v531 = vpop.f32.mrb[0].mxu0
  %532 = vmatprep.mubr.bf16.mxu0 0
  %533 = vmatmul.mubr.bf16.gmra.mrb[0].mxu0 %v372
  %v534 = vpop.f32.mrb[0].mxu0
  %v535 = vadd.f32 %v394, %v534
  %v536 = vpop.f32.mrb[0].mxu0
  %v537 = vpop.f32.mrb[0].mxu0
  %v538 = vadd.f32 %v394, %v537
  %v539 = vpop.f32.mrb[0].mxu0
  %540 = vdwg.mxu0
  %v541 = vmax.f32 %v479, 0.0
  %v542 = vmax.f32 %v482, 0.0
  %v543 = vmax.f32 %v487, 0.0
  %v544 = vmax.f32 %v490, 0.0
  %v545 = vmax.f32 %v495, 0.0
  %v546 = vmax.f32 %v498, 0.0
  %v547 = vmax.f32 %v503, 0.0
  %v548 = vmax.f32 %v506, 0.0
  %v549 = vmax.f32 %v511, 0.0
  %v550 = vmax.f32 %v514, 0.0
  %v551 = vmax.f32 %v519, 0.0
  %v552 = vmax.f32 %v522, 0.0
  %v553 = vmax.f32 %v527, 0.0
  %v554 = vmax.f32 %v530, 0.0
  %v555 = vmax.f32 %v535, 0.0
  %v556 = vmax.f32 %v538, 0.0
  %557 = vst [vmem:[%s5] sm:$0xff] %v541
  %558 = vst [vmem:[%s5 + $0x8] sm:$0xff] %v542
  %559 = vst [vmem:[%s5 + $0x10] sm:$0xff] %v543
  %560 = vst [vmem:[%s5 + $0x18] sm:$0xff] %v544
  %561 = vst [vmem:[%s5 + $0x20] sm:$0xff] %v545
  %562 = vst [vmem:[%s5 + $0x28] sm:$0xff] %v546
  %563 = vst [vmem:[%s5 + $0x30] sm:$0xff] %v547
  %564 = vst [vmem:[%s5 + $0x38] sm:$0xff] %v548
  %565 = vst [vmem:[%s5 + $0x40] sm:$0xff] %v549
  %566 = vst [vmem:[%s5 + $0x48] sm:$0xff] %v550
  %567 = vst [vmem:[%s5 + $0x50] sm:$0xff] %v551
  %568 = vst [vmem:[%s5 + $0x58] sm:$0xff] %v552
  %569 = vst [vmem:[%s5 + $0x60] sm:$0xff] %v553
  %570 = vst [vmem:[%s5 + $0x68] sm:$0xff] %v554
  %571 = vst [vmem:[%s5 + $0x70] sm:$0xff] %v555
  %572 = vst [vmem:[%s5 + $0x78] sm:$0xff] %v556
  // Predicated region
  $region22: #{fpn2mlp_forward.1} parent=0 // pred_check
    _
  $region23: #{fpn2mlp_forward.1} parent=0 // pred_check_branch
    %574 = sbr.rel (0) target = $region25
  $region24: #{fpn2mlp_forward.1} parent=0 // pred_region
    _
  $region25: #{fpn2mlp_forward.1} parent=0 // pred_fallthru
    _
  // Predicated region
  $region26: #{fpn2mlp_forward.1} parent=0 // pred_check
    _
  $region27: #{fpn2mlp_forward.1} parent=0 // pred_check_branch
    %576 = sbr.rel (0) target = $region29
  $region28: #{fpn2mlp_forward.1} parent=0 // pred_region
    _
  $region29: #{fpn2mlp_forward.1} parent=0 // pred_fallthru
    _

</llo_original>
